<compile_context>
chip_gen: v5e
topology: v5e:2x2
jax: 0.10.0
libtpu: 0.0.40
codegen_flags: <defaults>
</compile_context>

<pallas_src>
from functools import partial

import jax
import jax.numpy as jnp
from jax import lax
from jax.experimental import pallas as pl
from jax.experimental.pallas import tpu as pltpu


def _round_up(x, m):
    return (x + m - 1) // m * m


def _dual_fc_kernel(x_ref, w1t_ref, w2t_ref, b2_ref, w3t_ref, o_ref, *, rounding: bool):
    # x_ref  : (F_pad, TB)  packed features, batch on the lane axis
    # w1t_ref: (H1, F_pad)  W1^T with inventory row + (mean/std/b1 via ones row) folded in
    # w2t_ref: (H2e, H1)    W2^T zero-padded; extra rows have all-zero weights
    # b2_ref : (H2e, 1)     b2 column; row H2 is 1.0 -> constant-one row in h2
    # w3t_ref: (8, H2e)     rows 0/1 = [W3^T | b3 in column H2]; rows 2..7 zero
    # o_ref  : (2, TB)      lane-dense output tile
    h1 = jnp.maximum(
        jnp.dot(w1t_ref[...], x_ref[...], preferred_element_type=jnp.float32), 0.0)
    h2 = jnp.maximum(
        jnp.dot(w2t_ref[...], h1, preferred_element_type=jnp.float32) + b2_ref[...], 0.0)
    raw = jnp.dot(w3t_ref[...], h2, preferred_element_type=jnp.float32)   # (8, TB)
    q = jnp.maximum(raw[0:2, :], 0.0)                                     # (2, TB)
    if rounding:
        q = jnp.floor(q)                                                  # h - frac(h), h >= 0
    o_ref[...] = q


def dual_fc_forward(params, current_demand, current_inventory,
                    past_regular_orders, past_expedited_orders, demand_data,
                    mean=0.0, std=0.0, *, allow_rounding_correction=True,
                    tile_b=2048):
    """Mirrors the PyTorch forward; returns (qr, qe), each [B, 1] float32."""
    del current_demand  # accepted but unused, matching the PyTorch module's forward
    lr, le = params["lr"], params["le"]
    assert le >= 1, "kernel assumes le >= 1 (expedited features present)"
    assert tile_b % 128 == 0

    f32 = jnp.float32
    if isinstance(demand_data, (list, tuple)):
        demand_data = jnp.concatenate(demand_data, axis=-1)
    if isinstance(past_regular_orders, (list, tuple)):
        past_regular_orders = jnp.concatenate(past_regular_orders[-lr:], axis=-1)
    if isinstance(past_expedited_orders, (list, tuple)):
        past_expedited_orders = jnp.concatenate(past_expedited_orders[-le:], axis=-1)

    dem = demand_data.astype(f32)
    reg = past_regular_orders[:, -lr:].astype(f32)
    exp_ = past_expedited_orders[:, -le:].astype(f32)
    inv = current_inventory.reshape(-1, 1).astype(f32)

    B, T = dem.shape
    w1 = params["w1"].astype(f32)
    b1 = params["b1"].astype(f32).reshape(-1)
    w2 = params["w2"].astype(f32)
    b2 = params["b2"].astype(f32).reshape(-1)
    w3 = params["w3"].astype(f32)
    b3 = params["b3"].astype(f32).reshape(-1)
    H1, H2 = w1.shape[1], w2.shape[1]
    assert w1.shape[0] == lr + le + T + 2, "W1 rows must match lr + le + T + 2"

    # ---- batch tiling: lane-aligned tiles, >= 2 grid steps for mid-size B (v7x) ----
    if B > tile_b:
        tb = tile_b
    else:
        tb = max(128, _round_up(-(-B // 2), 128))
    B_pad = _round_up(B, tb)
    nb = B_pad // tb

    # ---- pack the batch-side features into one (F_pad, B_pad) slab ----
    # rows: [demand(T), reg(lr), exp(le), inventory, ones, zero-pad]
    F = T + lr + le + 1 + 1
    F_pad = _round_up(F, 8)
    x_feat = jnp.concatenate([dem, reg, exp_, inv, jnp.ones((B, 1), f32)], axis=1)  # (B, F)
    x_slab = jnp.zeros((F_pad, B_pad), f32).at[:F, :B].set(x_feat.T)

    # ---- pack W1: obs layout = [mean, std, demand(T), reg(lr), exp(le)] ----
    b1_eff = b1 + mean * w1[0] + std * w1[1]                   # fold mean/std into bias
    w1_rows = jnp.concatenate(
        [w1[2:2 + T],                    # demand
         w1[2 + T:2 + T + lr],           # regular orders
         w1[2 + T + lr:2 + T + lr + le], # expedited orders
         w1[2 + T:2 + T + 1],            # inventory  (== torch's reg_obs[:,0] += inv)
         b1_eff[None, :]],               # bias via the ones feature row
        axis=0)                                                 # (F, H1)
    w1t = jnp.zeros((H1, F_pad), f32).at[:, :F].set(w1_rows.T)  # (H1, F_pad)

    # ---- pack W2/b2 with an extra constant-one row (carries b3 through layer 3) ----
    H2e = _round_up(H2 + 1, 8)
    w2t_ext = jnp.zeros((H2e, H1), f32).at[:H2, :].set(w2.T)    # extra rows: zero weights
    b2_ext = jnp.zeros((H2e, 1), f32).at[:H2, 0].set(b2).at[H2, 0].set(1.0)

    # ---- pack W3^T (+ b3 in column H2), padded to 8 sublanes ----
    w3t_ext = jnp.zeros((8, H2e), f32).at[:2, :H2].set(w3.T).at[:2, H2].set(b3)

    const_spec = lambda shape: pl.BlockSpec(shape, lambda i: (0, 0))  # VMEM-resident

    out = pl.pallas_call(
        partial(_dual_fc_kernel, rounding=allow_rounding_correction),
        out_shape=jax.ShapeDtypeStruct((2, B_pad), f32),
        grid=(nb,),
        in_specs=[
            pl.BlockSpec((F_pad, tb), lambda i: (0, i)),   # packed features, batch on lanes
            const_spec((H1, F_pad)),
            const_spec((H2e, H1)),
            const_spec((H2e, 1)),
            const_spec((8, H2e)),
        ],
        out_specs=pl.BlockSpec((2, tb), lambda i: (0, i)),
        compiler_params=pltpu.CompilerParams(
            dimension_semantics=("parallel",)),
    )(x_slab, w1t, w2t_ext, b2_ext, w3t_ext)

    qr = out[0, :B][:, None]
    qe = out[1, :B][:, None]
    return qr, qe


def init_params(key, lr, le, T, n_hidden=(32, 32)):
    """Weights stored [in, out] (transpose of torch.nn.Linear.weight); same math."""
    F = lr + le + T + 2
    H1, H2 = n_hidden
    k1, k2, k3 = jax.random.split(key, 3)
    s = 0.1
    return dict(
        lr=lr, le=le,
        w1=s * jax.random.normal(k1, (F, H1), jnp.float32),
        b1=jnp.zeros((1, H1), jnp.float32),
        w2=s * jax.random.normal(k2, (H1, H2), jnp.float32),
        b2=jnp.zeros((1, H2), jnp.float32),
        w3=s * jax.random.normal(k3, (H2, 2), jnp.float32),
        b3=jnp.array([1.5, 2.5], jnp.float32),
    )


def _reference(params, current_demand, current_inventory, past_regular_orders,
               past_expedited_orders, demand_data, mean=0.0, std=0.0, *, rounding=True):
    """Pure-JAX mirror of the PyTorch forward (for validation)."""
    del current_demand
    lr, le = params["lr"], params["le"]
    f32 = jnp.float32
    inv = current_inventory.reshape(-1, 1).astype(f32)
    obs = [mean * jnp.ones_like(inv), std * jnp.ones_like(inv), demand_data.astype(f32)]
    reg = past_regular_orders[:, -lr:].astype(f32)
    reg = reg.at[:, 0].add(inv[:, 0])
    obs.append(reg)
    if le > 0:
        obs.append(past_expedited_orders[:, -le:].astype(f32))
    x = jnp.concatenate(obs, axis=-1)
    hi = lax.Precision.HIGHEST
    h = jax.nn.relu(jnp.dot(x, params["w1"], precision=hi) + params["b1"])
    h = jax.nn.relu(jnp.dot(h, params["w2"], precision=hi) + params["b2"])
    h = jax.nn.relu(jnp.dot(h, params["w3"], precision=hi) + params["b3"].reshape(1, -1))
    if rounding:
        h = jnp.floor(h)  # h - frac(h) with h >= 0
    return h[:, 0:1], h[:, 1:2]


if __name__ == "__main__":
    lr, le, T = 3, 2, 4
    B = 200                      # -> tb=128, padded to 256, 2 grid tiles (both TCs busy)
    key = jax.random.PRNGKey(0)
    kp, kd, ki, kr, ke, kq = jax.random.split(key, 6)
    params = init_params(kp, lr, le, T, n_hidden=(32, 32))

    current_demand = jax.random.uniform(kq, (B, 1), jnp.float32, 0.0, 10.0)
    current_inventory = jax.random.uniform(ki, (B, 1), jnp.float32, -5.0, 15.0)
    past_regular_orders = jax.random.uniform(kr, (B, lr + 2), jnp.float32, 0.0, 8.0)
    past_expedited_orders = jax.random.uniform(ke, (B, le), jnp.float32, 0.0, 4.0)
    demand_data = jax.random.uniform(kd, (B, T), jnp.float32, 0.0, 10.0)
    mean, std = 5.0, 2.0

    # 1) continuous (no rounding correction) output vs pure-JAX reference
    qr_c, qe_c = dual_fc_forward(params, current_demand, current_inventory,
                                 past_regular_orders, past_expedited_orders,
                                 demand_data, mean, std,
                                 allow_rounding_correction=False)
    qr_c, qe_c = jax.block_until_ready((qr_c, qe_c))
    qr_ref, qe_ref = _reference(params, current_demand, current_inventory,
                                past_regular_orders, past_expedited_orders,
                                demand_data, mean, std, rounding=False)
    assert qr_c.shape == (B, 1) and qe_c.shape == (B, 1)
    assert jnp.allclose(qr_c, qr_ref, atol=1e-2, rtol=1e-2)
    assert jnp.allclose(qe_c, qe_ref, atol=1e-2, rtol=1e-2)

    # 2) rounding-corrected output (module default) must be the floor of the
    #    continuous output (tolerate only exact-integer-boundary ambiguity)
    qr_r, qe_r = dual_fc_forward(params, current_demand, current_inventory,
                                 past_regular_orders, past_expedited_orders,
                                 demand_data, mean, std,
                                 allow_rounding_correction=True)
    qr_r, qe_r = jax.block_until_ready((qr_r, qe_r))
    ok_r = (qr_r == jnp.floor(qr_c)) | (jnp.abs(qr_c - jnp.round(qr_c)) < 1e-4)
    ok_e = (qe_r == jnp.floor(qe_c)) | (jnp.abs(qe_c - jnp.round(qe_c)) < 1e-4)
    assert bool(jnp.all(ok_r)) and bool(jnp.all(ok_e))

    print("KERNEL_OK")
</pallas_src>

<mosaic_0001>
module attributes {stable_mosaic.version = 11 : i64} {
  func.func @_dual_fc_kernel(%arg0: i32, %arg1: memref<16x128xf32, #tpu.memory_space<vmem>>, %arg2: memref<32x16xf32, #tpu.memory_space<vmem>>, %arg3: memref<40x32xf32, #tpu.memory_space<vmem>>, %arg4: memref<40x1xf32, #tpu.memory_space<vmem>>, %arg5: memref<8x40xf32, #tpu.memory_space<vmem>>, %arg6: memref<2x128xf32, #tpu.memory_space<vmem>>) attributes {dimension_semantics = [#tpu.dimension_semantics<parallel>], iteration_bounds = array<i64: 2>, scalar_prefetch = 0 : i64, scratch_operands = 0 : i64, tpu.core_type = #tpu.core_type<tc>, window_params = [{transform_indices = @transform_0, window_bounds = array<i64: 16, 128>}, {pipeline_mode = #tpu.pipeline_mode<synchronous>, transform_indices = @transform_1, window_bounds = array<i64: 32, 16>}, {pipeline_mode = #tpu.pipeline_mode<synchronous>, transform_indices = @transform_2, window_bounds = array<i64: 40, 32>}, {pipeline_mode = #tpu.pipeline_mode<synchronous>, transform_indices = @transform_3, window_bounds = array<i64: 40, 1>}, {pipeline_mode = #tpu.pipeline_mode<synchronous>, transform_indices = @transform_4, window_bounds = array<i64: 8, 40>}, {transform_indices = @transform_5, window_bounds = array<i64: 2, 128>}]} {
    %c0 = arith.constant 0 : index
    %c0_0 = arith.constant 0 : index
    %0 = vector.load %arg2[%c0, %c0_0] : memref<32x16xf32, #tpu.memory_space<vmem>>, vector<32x16xf32>
    %c0_1 = arith.constant 0 : index
    %c0_2 = arith.constant 0 : index
    %1 = vector.load %arg1[%c0_1, %c0_2] : memref<16x128xf32, #tpu.memory_space<vmem>>, vector<16x128xf32>
    %cst = arith.constant dense<0.000000e+00> : vector<32x128xf32>
    %2 = tpu.matmul %0, %1, %cst {dimension_numbers = #tpu.dot_dimension_numbers<[1], [0], [0], [1], [0, 0, 1, 1], [], []>} : vector<32x16xf32>, vector<16x128xf32>, vector<32x128xf32> -> vector<32x128xf32>
    %cst_3 = arith.constant 0.000000e+00 : f32
    %3 = vector.broadcast %cst_3 : f32 to vector<32x128xf32>
    %4 = arith.maximumf %2, %3 : vector<32x128xf32>
    %c0_4 = arith.constant 0 : index
    %c0_5 = arith.constant 0 : index
    %5 = vector.load %arg3[%c0_4, %c0_5] : memref<40x32xf32, #tpu.memory_space<vmem>>, vector<40x32xf32>
    %cst_6 = arith.constant dense<0.000000e+00> : vector<40x128xf32>
    %6 = tpu.matmul %5, %4, %cst_6 {dimension_numbers = #tpu.dot_dimension_numbers<[1], [0], [0], [1], [0, 0, 1, 1], [], []>} : vector<40x32xf32>, vector<32x128xf32>, vector<40x128xf32> -> vector<40x128xf32>
    %c0_7 = arith.constant 0 : index
    %c0_8 = arith.constant 0 : index
    %7 = vector.load %arg4[%c0_7, %c0_8] : memref<40x1xf32, #tpu.memory_space<vmem>>, vector<40x1xf32>
    %8 = vector.broadcast %7 : vector<40x1xf32> to vector<40x128xf32>
    %9 = arith.addf %6, %8 : vector<40x128xf32>
    %cst_9 = arith.constant 0.000000e+00 : f32
    %10 = vector.broadcast %cst_9 : f32 to vector<40x128xf32>
    %11 = arith.maximumf %9, %10 : vector<40x128xf32>
    %c0_10 = arith.constant 0 : index
    %c0_11 = arith.constant 0 : index
    %12 = vector.load %arg5[%c0_10, %c0_11] : memref<8x40xf32, #tpu.memory_space<vmem>>, vector<8x40xf32>
    %cst_12 = arith.constant dense<0.000000e+00> : vector<8x128xf32>
    %13 = tpu.matmul %12, %11, %cst_12 {dimension_numbers = #tpu.dot_dimension_numbers<[1], [0], [0], [1], [0, 0, 1, 1], [], []>} : vector<8x40xf32>, vector<40x128xf32>, vector<8x128xf32> -> vector<8x128xf32>
    %14 = vector.extract_strided_slice %13 {offsets = [0, 0], sizes = [2, 128], strides = [1, 1]} : vector<8x128xf32> to vector<2x128xf32>
    %cst_13 = arith.constant 0.000000e+00 : f32
    %15 = vector.broadcast %cst_13 : f32 to vector<2x128xf32>
    %16 = arith.maximumf %14, %15 : vector<2x128xf32>
    %c0_14 = arith.constant 0 : index
    %c0_15 = arith.constant 0 : index
    %17 = vector.load %arg6[%c0_14, %c0_15] : memref<2x128xf32, #tpu.memory_space<vmem>>, vector<2x128xf32>
    tpu.vector_store %arg6[%c0_14, %c0_15], %16 {strides = array<i32>} : memref<2x128xf32, #tpu.memory_space<vmem>>, vector<2x128xf32>,
    return
  }
  func.func @transform_0(%arg0: i32) -> (i32, i32) {
    %c0_i32 = arith.constant 0 : i32
    %c0_i32_0 = arith.constant 0 : i32
    return %c0_i32, %arg0 : i32, i32
  }
  func.func @transform_1(%arg0: i32) -> (i32, i32) {
    %c0_i32 = arith.constant 0 : i32
    %c0_i32_0 = arith.constant 0 : i32
    %c0_i32_1 = arith.constant 0 : i32
    return %c0_i32, %c0_i32_0 : i32, i32
  }
  func.func @transform_2(%arg0: i32) -> (i32, i32) {
    %c0_i32 = arith.constant 0 : i32
    %c0_i32_0 = arith.constant 0 : i32
    %c0_i32_1 = arith.constant 0 : i32
    return %c0_i32, %c0_i32_0 : i32, i32
  }
  func.func @transform_3(%arg0: i32) -> (i32, i32) {
    %c0_i32 = arith.constant 0 : i32
    %c0_i32_0 = arith.constant 0 : i32
    %c0_i32_1 = arith.constant 0 : i32
    return %c0_i32, %c0_i32_0 : i32, i32
  }
  func.func @transform_4(%arg0: i32) -> (i32, i32) {
    %c0_i32 = arith.constant 0 : i32
    %c0_i32_0 = arith.constant 0 : i32
    %c0_i32_1 = arith.constant 0 : i32
    return %c0_i32, %c0_i32_0 : i32, i32
  }
  func.func @transform_5(%arg0: i32) -> (i32, i32) {
    %c0_i32 = arith.constant 0 : i32
    %c0_i32_0 = arith.constant 0 : i32
    return %c0_i32, %arg0 : i32, i32
  }
}

</mosaic_0001>

<llo_original>
// kernel: tpu_custom_call.1
$region0: #{tpu_custom_call.1}
  #allocation0 [shape = 'u32[]', space=smem, size = 0x4, offset = 0x4, fixed_abs, tag = 'smem constant byte address 0x4 - core index']
  #allocation1 [shape = 'u32[72,128]{1,0:T(1,128)}', space=vmem, size = 0x9000, scoped, tag = 'internal scratch']
  %s0 = inlined_call_operand.vmem [shape: f32[16,256], index: 0, kind: input, shape index: {}]
  %s1 = inlined_call_operand.vmem [shape: f32[32,16], index: 1, kind: input, shape index: {}]
  %s2 = inlined_call_operand.vmem [shape: f32[40,32], index: 2, kind: input, shape index: {}]
  %s3 = inlined_call_operand.vmem [shape: f32[40,1], index: 3, kind: input, shape index: {}]
  %s4 = inlined_call_operand.vmem [shape: f32[8,40], index: 4, kind: input, shape index: {}]
  %s5 = inlined_call_operand.hbm [shape: f32[2,256], index: 5, kind: output, shape index: {}]
  %s6 = sld [smem:[#allocation0]]
  $region91: #{tpu_custom_call.1} parent=0
    _
  %s8 = ssub.s32 1, %s6
  %s9 = scalar_select 0, %s8, %s6
  $region1: #{tpu_custom_call.1} parent=0
    #allocation2 [shape = 'u8[16384]{0}', space=vmem, size = 0x4000, scoped, tag = 'input window, operand 0']
    #allocation3 [shape = 'u8[2048]{0}', space=vmem, size = 0x800, scoped, tag = 'output window, operand 0']
    #allocation4 [shape = 's32[2]{0}', space=sflag, size = 0x8, scoped, tag = 'scoped memory for tpu_custom_call.1']
    %10 = vsyncpa [#allocation4], 0
    %s11 = scalar_lea.sflag [#allocation4], 1
    %12 = vsyncpa %s11, 0
    loop: start=0, step=1, limit=4
    $region2: #{tpu_custom_call.1} parent=1 // loop_pre_header
      _
    $region3: #{tpu_custom_call.1} parent=1 // loop_header
      %s14 = sphi 0, %s18
      %p15 = scmp.ge.s32.totalorder %s14, 4
      %s24 = sphi 0, %s26
      %s27 = sphi 0, %s24
      %s28 = sphi 0, %s27
      %s44 = sphi 0, %s28
      %s48 = sphi 0, %s48
      %s50 = sphi 0, %s48
      %s51 = sphi 0, %s50
      %s65 = sphi 0, %s51
      %s69 = sphi 0, %s69
      %s71 = sphi 0, %s69
      %s72 = sphi 0, %s71
      %s86 = sphi 0, %s72
      %s90 = sphi 0, %s90
      %s92 = sphi 0, %s90
      %s93 = sphi 0, %s92
      %s107 = sphi 0, %s93
      %s111 = sphi 0, %s111
      %s113 = sphi 0, %s111
      %s114 = sphi 0, %s113
      %s128 = sphi 0, %s114
      %s134 = sphi 0, %s136
      %s137 = sphi 0, %s134
      %s138 = sphi 0, %s137
      %s154 = sphi 0, %s138
    $region4: #{tpu_custom_call.1} parent=1 // loop_header_branch
      %17 = sbr.rel (%p15) target = $region8
    $region5: #{tpu_custom_call.1} parent=1 // loop_body
      %s19 = ssub.s32 %s14, 1
      %s20 = ssub.s32 %s14, 2
      %s21 = sadd.s32 %s14, 1
      %s22 = ssub.s32 %s14, %s21
      %p23 = scmp.eq.s32.totalorder %s22, 0
      %s25 = sadd.s32 %s24, 1
      %s26 = scalar_select %p23, %s24, %s25
      %p29 = pneg %p23
      %p30 = scmp.eq.s32.totalorder %s14, 1
      %p31 = por %p29, %p30
      %p32 = scmp.ne.s32.totalorder %s24, %s27
      %p33 = scmp.eq.s32.totalorder %s14, 0
      %p34 = por %p32, %p33
      %p35 = scmp.ne.s32.totalorder %s24, %s27
      %p36 = scmp.eq.s32.totalorder %s19, 1
      %p37 = por %p35, %p36
      %p38 = scmp.ne.s32.totalorder %s27, %s28
      %p39 = scmp.eq.s32.totalorder %s19, 0
      %p40 = por %p38, %p39
      %p41 = scmp.ne.s32.totalorder %s27, %s28
      %p42 = scmp.eq.s32.totalorder %s20, 1
      %p43 = por %p41, %p42
      %p45 = scmp.ne.s32.totalorder %s28, %s44
      %p46 = scmp.eq.s32.totalorder %s20, 0
      %p47 = por %p45, %p46
      %s49 = sadd.s32 %s48, 1
      %p52 = scmp.eq.s32.totalorder %s14, 1
      %p53 = scmp.ne.s32.totalorder %s48, %s50
      %p54 = scmp.eq.s32.totalorder %s14, 0
      %p55 = por %p53, %p54
      %p56 = scmp.ne.s32.totalorder %s48, %s50
      %p57 = scmp.eq.s32.totalorder %s19, 1
      %p58 = por %p56, %p57
      %p59 = scmp.ne.s32.totalorder %s50, %s51
      %p60 = scmp.eq.s32.totalorder %s19, 0
      %p61 = por %p59, %p60
      %p62 = scmp.ne.s32.totalorder %s50, %s51
      %p63 = scmp.eq.s32.totalorder %s20, 1
      %p64 = por %p62, %p63
      %p66 = scmp.ne.s32.totalorder %s51, %s65
      %p67 = scmp.eq.s32.totalorder %s20, 0
      %p68 = por %p66, %p67
      %s70 = sadd.s32 %s69, 1
      %p73 = scmp.eq.s32.totalorder %s14, 1
      %p74 = scmp.ne.s32.totalorder %s69, %s71
      %p75 = scmp.eq.s32.totalorder %s14, 0
      %p76 = por %p74, %p75
      %p77 = scmp.ne.s32.totalorder %s69, %s71
      %p78 = scmp.eq.s32.totalorder %s19, 1
      %p79 = por %p77, %p78
      %p80 = scmp.ne.s32.totalorder %s71, %s72
      %p81 = scmp.eq.s32.totalorder %s19, 0
      %p82 = por %p80, %p81
      %p83 = scmp.ne.s32.totalorder %s71, %s72
      %p84 = scmp.eq.s32.totalorder %s20, 1
      %p85 = por %p83, %p84
      %p87 = scmp.ne.s32.totalorder %s72, %s86
      %p88 = scmp.eq.s32.totalorder %s20, 0
      %p89 = por %p87, %p88
      %s91 = sadd.s32 %s90, 1
      %p94 = scmp.eq.s32.totalorder %s14, 1
      %p95 = scmp.ne.s32.totalorder %s90, %s92
      %p96 = scmp.eq.s32.totalorder %s14, 0
      %p97 = por %p95, %p96
      %p98 = scmp.ne.s32.totalorder %s90, %s92
      %p99 = scmp.eq.s32.totalorder %s19, 1
      %p100 = por %p98, %p99
      %p101 = scmp.ne.s32.totalorder %s92, %s93
      %p102 = scmp.eq.s32.totalorder %s19, 0
      %p103 = por %p101, %p102
      %p104 = scmp.ne.s32.totalorder %s92, %s93
      %p105 = scmp.eq.s32.totalorder %s20, 1
      %p106 = por %p104, %p105
      %p108 = scmp.ne.s32.totalorder %s93, %s107
      %p109 = scmp.eq.s32.totalorder %s20, 0
      %p110 = por %p108, %p109
      %s112 = sadd.s32 %s111, 1
      %p115 = scmp.eq.s32.totalorder %s14, 1
      %p116 = scmp.ne.s32.totalorder %s111, %s113
      %p117 = scmp.eq.s32.totalorder %s14, 0
      %p118 = por %p116, %p117
      %p119 = scmp.ne.s32.totalorder %s111, %s113
      %p120 = scmp.eq.s32.totalorder %s19, 1
      %p121 = por %p119, %p120
      %p122 = scmp.ne.s32.totalorder %s113, %s114
      %p123 = scmp.eq.s32.totalorder %s19, 0
      %p124 = por %p122, %p123
      %p125 = scmp.ne.s32.totalorder %s113, %s114
      %p126 = scmp.eq.s32.totalorder %s20, 1
      %p127 = por %p125, %p126
      %p129 = scmp.ne.s32.totalorder %s114, %s128
      %p130 = scmp.eq.s32.totalorder %s20, 0
      %p131 = por %p129, %p130
      %s132 = ssub.s32 %s14, %s21
      %p133 = scmp.eq.s32.totalorder %s132, 0
      %s135 = sadd.s32 %s134, 1
      %s136 = scalar_select %p133, %s134, %s135
      %p139 = pneg %p133
      %p140 = scmp.eq.s32.totalorder %s14, 1
      %p141 = por %p139, %p140
      %p142 = scmp.ne.s32.totalorder %s134, %s137
      %p143 = scmp.eq.s32.totalorder %s14, 0
      %p144 = por %p142, %p143
      %p145 = scmp.ne.s32.totalorder %s134, %s137
      %p146 = scmp.eq.s32.totalorder %s19, 1
      %p147 = por %p145, %p146
      %p148 = scmp.ne.s32.totalorder %s137, %s138
      %p149 = scmp.eq.s32.totalorder %s19, 0
      %p150 = por %p148, %p149
      %p151 = scmp.ne.s32.totalorder %s137, %s138
      %p152 = scmp.eq.s32.totalorder %s20, 1
      %p153 = por %p151, %p152
      %p155 = scmp.ne.s32.totalorder %s138, %s154
      %p156 = scmp.eq.s32.totalorder %s20, 0
      %p157 = por %p155, %p156
      %p158 = scmp.le.s32.totalorder 1, %s14
      %p159 = scmp.lt.s32.totalorder %s14, 3
      %p160 = pnand %p158, %p159
      %p161 = pneg %p160
      // Predicated region
      $region9: #{tpu_custom_call.1} parent=5 // pred_check
        _
      $region10: #{tpu_custom_call.1} parent=5 // pred_check_branch
        %163 = sbr.rel (%p160) target = $region12
      $region11: #{tpu_custom_call.1} parent=5 // pred_region
        %s164 = ssub.s32 %s14, 1
        // Predicated region
        $region13: #{tpu_custom_call.1} parent=11 // pred_check
          %p165 = pneg %p61
        $region14: #{tpu_custom_call.1} parent=11 // pred_check_branch
          %167 = sbr.rel (%p165) target = $region16
        $region15: #{tpu_custom_call.1} parent=11 // pred_region
          _
        $region16: #{tpu_custom_call.1} parent=11 // pred_fallthru
          _
        // Predicated region
        $region17: #{tpu_custom_call.1} parent=11 // pred_check
          %p168 = pneg %p82
        $region18: #{tpu_custom_call.1} parent=11 // pred_check_branch
          %170 = sbr.rel (%p168) target = $region20
        $region19: #{tpu_custom_call.1} parent=11 // pred_region
          _
        $region20: #{tpu_custom_call.1} parent=11 // pred_fallthru
          _
        // Predicated region
        $region21: #{tpu_custom_call.1} parent=11 // pred_check
          %p171 = pneg %p103
        $region22: #{tpu_custom_call.1} parent=11 // pred_check_branch
          %173 = sbr.rel (%p171) target = $region24
        $region23: #{tpu_custom_call.1} parent=11 // pred_region
          _
        $region24: #{tpu_custom_call.1} parent=11 // pred_fallthru
          _
        // Predicated region
        $region25: #{tpu_custom_call.1} parent=11 // pred_check
          %p174 = pneg %p124
        $region26: #{tpu_custom_call.1} parent=11 // pred_check_branch
          %176 = sbr.rel (%p174) target = $region28
        $region27: #{tpu_custom_call.1} parent=11 // pred_region
          _
        $region28: #{tpu_custom_call.1} parent=11 // pred_fallthru
          _
      $region12: #{tpu_custom_call.1} parent=5 // pred_fallthru
        _
      %p177 = scmp.lt.s32.totalorder %s14, 2
      // Predicated region
      $region29: #{tpu_custom_call.1} parent=5 // pred_check
        %p178 = pneg %p177
      $region30: #{tpu_custom_call.1} parent=5 // pred_check_branch
        %180 = sbr.rel (%p178) target = $region32
      $region31: #{tpu_custom_call.1} parent=5 // pred_region
        // Predicated region
        $region33: #{tpu_custom_call.1} parent=31 // pred_check
          %p181 = pneg %p34
        $region34: #{tpu_custom_call.1} parent=31 // pred_check_branch
          %183 = sbr.rel (%p181) target = $region36
        $region35: #{tpu_custom_call.1} parent=31 // pred_region
          %s184 = sand.u32 %s24, 1
          %s185 = sand.u32 %s24, 1
          %s186 = smul.addr %s185, 16
          %s187 = scalar_lea.vmem [#allocation2], %s186
          %s188 = smul.addr %s14, 8
          %s189 = scalar_lea.vmem %s0, %s188
          // Predicated region
          $region37: #{tpu_custom_call.1} parent=35 // pred_check
            _
          $region38: #{tpu_custom_call.1} parent=35 // pred_check_branch
            %191 = sbr.rel (0) target = $region40
          $region39: #{tpu_custom_call.1} parent=35 // pred_region
            // Predicated region
            $region41: #{tpu_custom_call.1} parent=39 // pred_check
              _
            $region42: #{tpu_custom_call.1} parent=39 // pred_check_branch
              %193 = sbr.rel (0) target = $region44
            $region43: #{tpu_custom_call.1} parent=39 // pred_region
              // Predicated region
              $region56: #{tpu_custom_call.1} parent=43 // pred_check
                _
              $region57: #{tpu_custom_call.1} parent=43 // pred_check_branch
                %211 = sbr.rel (0) target = $region59
              $region58: #{tpu_custom_call.1} parent=43 // pred_region
                loop: start=0, step=1, limit=1
                $region60: #{tpu_custom_call.1} parent=58 // loop_pre_header
                  _
                $region61: #{tpu_custom_call.1} parent=58 // loop_header
                  %s213 = sphi 0, %s217
                  %p214 = scmp.ge.s32.totalorder %s213, 1
                  %s218 = sphi %s189, %s189
                  %s219 = sphi %s187, %s187
                $region62: #{tpu_custom_call.1} parent=58 // loop_header_branch
                  %216 = sbr.rel (%p214) target = $region66
                $region63: #{tpu_custom_call.1} parent=58 // loop_body
                  %v220 = vld [vmem:[%s218] sm:$0xff]
                  %221 = vst [vmem:[%s219] sm:$0xff] %v220
                  %v222 = vld [vmem:[%s218 + $0x10] sm:$0xff]
                  %223 = vst [vmem:[%s219 + $0x8] sm:$0xff] %v222
                $region64: #{tpu_custom_call.1} parent=58 // loop_footer
                  %s217 = sadd.s32 1, %s213
                $region65: #{tpu_custom_call.1} parent=58 // loop_footer_branch
                  %212 = sbr.rel target = $region61
                $region66: #{tpu_custom_call.1} parent=58 // loop_exit
                  _
              $region59: #{tpu_custom_call.1} parent=43 // pred_fallthru
                _
              // Predicated region
              $region67: #{tpu_custom_call.1} parent=43 // pred_check
                _
              $region68: #{tpu_custom_call.1} parent=43 // pred_check_branch
                %225 = sbr.rel target = $region70
              $region69: #{tpu_custom_call.1} parent=43 // pred_region
                _
              $region70: #{tpu_custom_call.1} parent=43 // pred_fallthru
                _
            $region44: #{tpu_custom_call.1} parent=39 // pred_fallthru
              _
            // Predicated region
            $region45: #{tpu_custom_call.1} parent=39 // pred_check
              _
            $region46: #{tpu_custom_call.1} parent=39 // pred_check_branch
              %195 = sbr.rel target = $region48
            $region47: #{tpu_custom_call.1} parent=39 // pred_region
              %s197 = ssub.s32 256, 1
              loop: start=0, step=1, limit=1
              $region49: #{tpu_custom_call.1} parent=47 // loop_pre_header
                _
              $region50: #{tpu_custom_call.1} parent=47 // loop_header
                %s199 = sphi 0, %s203
                %p200 = scmp.ge.s32.totalorder %s199, 1
                %s204 = sphi %s189, %s189
                %s205 = sphi %s187, %s187
              $region51: #{tpu_custom_call.1} parent=47 // loop_header_branch
                %202 = sbr.rel (%p200) target = $region55
              $region52: #{tpu_custom_call.1} parent=47 // loop_body
                %v206 = vld [vmem:[%s204] sm:%s197]
                %207 = vst [vmem:[%s205] sm:%s197] %v206
                %v208 = vld [vmem:[%s204 + $0x10] sm:%s197]
                %209 = vst [vmem:[%s205 + $0x8] sm:%s197] %v208
              $region53: #{tpu_custom_call.1} parent=47 // loop_footer
                %s203 = sadd.s32 1, %s199
              $region54: #{tpu_custom_call.1} parent=47 // loop_footer_branch
                %198 = sbr.rel target = $region50
              $region55: #{tpu_custom_call.1} parent=47 // loop_exit
                _
            $region48: #{tpu_custom_call.1} parent=39 // pred_fallthru
              _
          $region40: #{tpu_custom_call.1} parent=35 // pred_fallthru
            _
          %226 = vnop
        $region36: #{tpu_custom_call.1} parent=31 // pred_fallthru
          _
      $region32: #{tpu_custom_call.1} parent=5 // pred_fallthru
        _
      %p227 = scmp.le.s32.totalorder 1, %s14
      %p228 = scmp.lt.s32.totalorder %s14, 3
      %p229 = pnand %p227, %p228
      %p230 = pneg %p229
      // Predicated region
      $region71: #{tpu_custom_call.1} parent=5 // pred_check
        _
      $region72: #{tpu_custom_call.1} parent=5 // pred_check_branch
        %232 = sbr.rel (%p229) target = $region74
      $region73: #{tpu_custom_call.1} parent=5 // pred_region
        %s233 = ssub.s32 %s14, 1
        %s234 = sand.u32 %s27, 1
        %s235 = sand.u32 %s27, 1
        %s236 = smul.addr %s235, 16
        %s237 = scalar_lea.vmem [#allocation2], %s236
        // Predicated region
        $region75: #{tpu_custom_call.1} parent=73 // pred_check
          %p238 = pneg %p40
        $region76: #{tpu_custom_call.1} parent=73 // pred_check_branch
          %240 = sbr.rel (%p238) target = $region78
        $region77: #{tpu_custom_call.1} parent=73 // pred_region
          _
        $region78: #{tpu_custom_call.1} parent=73 // pred_fallthru
          _
        %s241 = sand.u32 %s27, 1
        %s242 = sand.u32 %s27, 1
        %s243 = smul.addr %s242, 16
        %s244 = scalar_lea.vmem [#allocation2], %s243
        %p245 = pneg %p40
        %p246 = pneg %p37
        %p247 = pneg %p61
        %p248 = pneg %p58
        %p249 = pneg %p82
        %p250 = pneg %p79
        %p251 = pneg %p103
        %p252 = pneg %p100
        %p253 = pneg %p124
        %p254 = pneg %p121
        %p255 = pneg %p150
        %p256 = pneg %p147
        %s257 = sand.u32 %s137, 1
        %s258 = scalar_lea.sflag [#allocation4], %s257
        %s259 = sand.u32 %s137, 1
        %s260 = smul.addr %s259, 2
        %s261 = scalar_lea.vmem [#allocation3], %s260
        %v262 = vld [vmem:[%s1] sm:$0xff]
        %v263 = vld [vmem:[%s1 + $0x8] sm:$0xff]
        %v264 = vld [vmem:[%s1 + $0x10] sm:$0xff]
        %v265 = vld [vmem:[%s1 + $0x18] sm:$0xff]
        %v266 = vld [vmem:[%s237] sm:$0xff]
        %v267 = vld [vmem:[%s237 + $0x8] sm:$0xff]
        %vm268 = vcmask 130048
        %v270 = vsel %vm268, %v262, 0
        %v273 = vsel %vm268, %v263, 0
        %v276 = vsel %vm268, %v264, 0
        %v279 = vsel %vm268, %v265, 0
        %281 = vmatpush.msra.mxu0 0.0
        %282 = vmatpush.msra.mxu0 0.0
        %283 = vmatpush.msra.mxu0 0.0
        %284 = vmatpush.msra.mxu0 0.0
        %285 = vmatpush.msra.mxu0 0.0
        %286 = vmatpush.msra.mxu0 0.0
        %287 = vmatpush.msra.mxu0 0.0
        %288 = vmatpush.msra.mxu0 0.0
        %289 = vmatpush.msra.mxu0 0.0
        %290 = vmatpush.msra.mxu0 0.0
        %291 = vmatpush.msra.mxu0 0.0
        %292 = vmatpush.msra.mxu0 0.0
        %293 = vmatpush.msra.mxu0 0.0
        %294 = vmatpush.msra.mxu0 0.0
        %295 = vmatpush.msra.mxu0 %v267
        %296 = vmatpush.msra.mxu0 %v266
        %297 = vmatmul.f32.gmra.mxu0 %v270
        %v298 = vpop.f32.mrf.mxu0
        %v299 = vadd.f32 0.0, %v298
        %300 = vmatmul.f32.gmra.mxu0 %v273
        %v301 = vpop.f32.mrf.mxu0
        %v302 = vadd.f32 0.0, %v301
        %303 = vmatmul.f32.gmra.mxu0 %v276
        %v304 = vpop.f32.mrf.mxu0
        %v305 = vadd.f32 0.0, %v304
        %306 = vmatmul.f32.gmra.mxu0 %v279
        %v307 = vpop.f32.mrf.mxu0
        %v308 = vadd.f32 0.0, %v307
        %309 = vdwg.mxu0
        %v310 = vmax.f32 %v299, 0.0
        %v311 = vmax.f32 %v302, 0.0
        %v312 = vmax.f32 %v305, 0.0
        %v313 = vmax.f32 %v308, 0.0
        %v314 = vld [vmem:[%s2] sm:$0xff]
        %v315 = vld [vmem:[%s2 + $0x8] sm:$0xff]
        %v316 = vld [vmem:[%s2 + $0x10] sm:$0xff]
        %v317 = vld [vmem:[%s2 + $0x18] sm:$0xff]
        %v318 = vld [vmem:[%s2 + $0x20] sm:$0xff]
        %v319 = vld [vmem:[%s3] sm:$0xff]
        %v320 = vld [vmem:[%s3 + $0x8] sm:$0xff]
        %v321 = vld [vmem:[%s3 + $0x10] sm:$0xff]
        %v322 = vld [vmem:[%s3 + $0x18] sm:$0xff]
        %v323 = vld [vmem:[%s3 + $0x20] sm:$0xff]
        %325 = vset.pattern.permute.xlu0 0
        %326 = vperm.xlu0 %325, %v319
        %v327 = vpop.permute.xlu0 %326
        %330 = vset.pattern.permute.xlu0 0
        %331 = vperm.xlu0 %330, %v320
        %v332 = vpop.permute.xlu0 %331
        %335 = vset.pattern.permute.xlu0 0
        %336 = vperm.xlu0 %335, %v321
        %v337 = vpop.permute.xlu0 %336
        %340 = vset.pattern.permute.xlu0 0
        %341 = vperm.xlu0 %340, %v322
        %v342 = vpop.permute.xlu0 %341
        %345 = vset.pattern.permute.xlu0 0
        %346 = vperm.xlu0 %345, %v323
        %v347 = vpop.permute.xlu0 %346
        %vm349 = vcmask 261120
        %v351 = vsel %vm349, %v314, 0
        %v354 = vsel %vm349, %v315, 0
        %v357 = vsel %vm349, %v316, 0
        %v360 = vsel %vm349, %v317, 0
        %v363 = vsel %vm349, %v318, 0
        %365 = vmatpush.msra.mxu0 0.0
        %366 = vmatpush.msra.mxu0 0.0
        %367 = vmatpush.msra.mxu0 0.0
        %368 = vmatpush.msra.mxu0 0.0
        %369 = vmatpush.msra.mxu0 0.0
        %370 = vmatpush.msra.mxu0 0.0
        %371 = vmatpush.msra.mxu0 0.0
        %372 = vmatpush.msra.mxu0 0.0
        %373 = vmatpush.msra.mxu0 0.0
        %374 = vmatpush.msra.mxu0 0.0
        %375 = vmatpush.msra.mxu0 0.0
        %376 = vmatpush.msra.mxu0 0.0
        %377 = vmatpush.msra.mxu0 %v313
        %378 = vmatpush.msra.mxu0 %v312
        %379 = vmatpush.msra.mxu0 %v311
        %380 = vmatpush.msra.mxu0 %v310
        %381 = vmatmul.f32.gmra.mxu0 %v351
        %v382 = vpop.f32.mrf.mxu0
        %v383 = vadd.f32 %v327, %v382
        %384 = vmatmul.f32.gmra.mxu0 %v354
        %v385 = vpop.f32.mrf.mxu0
        %v386 = vadd.f32 %v332, %v385
        %387 = vmatmul.f32.gmra.mxu0 %v357
        %v388 = vpop.f32.mrf.mxu0
        %v389 = vadd.f32 %v337, %v388
        %390 = vmatmul.f32.gmra.mxu0 %v360
        %v391 = vpop.f32.mrf.mxu0
        %v392 = vadd.f32 %v342, %v391
        %393 = vmatmul.f32.gmra.mxu0 %v363
        %v394 = vpop.f32.mrf.mxu0
        %v395 = vadd.f32 %v347, %v394
        %396 = vdwg.mxu0
        %v397 = vmax.f32 %v383, 0.0
        %v398 = vmax.f32 %v386, 0.0
        %v399 = vmax.f32 %v389, 0.0
        %v400 = vmax.f32 %v392, 0.0
        %v401 = vmax.f32 %v395, 0.0
        %v402 = vld [vmem:[%s4] sm:$0xff]
        %vm403 = vcmask 326656
        %v405 = vsel %vm403, %v402, 0
        %407 = vmatpush.msra.mxu0 0.0
        %408 = vmatpush.msra.mxu0 0.0
        %409 = vmatpush.msra.mxu0 0.0
        %410 = vmatpush.msra.mxu0 0.0
        %411 = vmatpush.msra.mxu0 0.0
        %412 = vmatpush.msra.mxu0 0.0
        %413 = vmatpush.msra.mxu0 0.0
        %414 = vmatpush.msra.mxu0 0.0
        %415 = vmatpush.msra.mxu0 0.0
        %416 = vmatpush.msra.mxu0 0.0
        %417 = vmatpush.msra.mxu0 0.0
        %418 = vmatpush.msra.mxu0 %v401
        %419 = vmatpush.msra.mxu0 %v400
        %420 = vmatpush.msra.mxu0 %v399
        %421 = vmatpush.msra.mxu0 %v398
        %422 = vmatpush.msra.mxu0 %v397
        %423 = vmatmul.f32.gmra.mxu0 %v405
        %v424 = vpop.f32.mrf.mxu0
        %v425 = vadd.f32 0.0, %v424
        %426 = vdwg.mxu0
        %v427 = vmax.f32 %v425, 0.0
        %428 = vst [vmem:[%s261] sm:$0x3] %v427
        %s429 = sand.u32 %s137, 1
        %s430 = scalar_lea.sflag [#allocation4], %s429
        %s431 = sand.u32 %s137, 1
        %s432 = smul.addr %s431, 2
        %s433 = scalar_lea.vmem [#allocation3], %s432
        // Predicated region
        $region79: #{tpu_custom_call.1} parent=73 // pred_check
          %p434 = pneg %p147
        $region80: #{tpu_custom_call.1} parent=73 // pred_check_branch
          %436 = sbr.rel (%p434) target = $region82
        $region81: #{tpu_custom_call.1} parent=73 // pred_region
          %438 = vsyncadd %s430, 0
          %s439 = smul.addr %s19, 2
          %s440 = scalar_lea.hbm %s5, %s439
          %s442 = sshll.u32 %s433, 4
          %s443 = int_to_ptr.vmem [resolvable:$true] %s442
          %s444 = sshll.u32 %s440, 4
          %s445 = int_to_ptr.hbm [resolvable:$true] %s444
          %447 = dma.vmem_to_hbm [thread:$0]  %s443, 32, %s445, %s430
        $region82: #{tpu_custom_call.1} parent=73 // pred_fallthru
          _
      $region74: #{tpu_custom_call.1} parent=5 // pred_fallthru
        _
      %p448 = scmp.le.s32.totalorder 2, %s14
      // Predicated region
      $region83: #{tpu_custom_call.1} parent=5 // pred_check
        %p449 = pneg %p448
      $region84: #{tpu_custom_call.1} parent=5 // pred_check_branch
        %451 = sbr.rel (%p449) target = $region86
      $region85: #{tpu_custom_call.1} parent=5 // pred_region
        %s452 = ssub.s32 %s14, 2
        // Predicated region
        $region87: #{tpu_custom_call.1} parent=85 // pred_check
          %p453 = pneg %p153
        $region88: #{tpu_custom_call.1} parent=85 // pred_check_branch
          %455 = sbr.rel (%p453) target = $region90
        $region89: #{tpu_custom_call.1} parent=85 // pred_region
          %s456 = sand.u32 %s138, 1
          %s457 = scalar_lea.sflag [#allocation4], %s456
          %s458 = sand.u32 %s138, 1
          %s459 = smul.addr %s458, 2
          %s460 = scalar_lea.vmem [#allocation3], %s459
          %462 = dma.done %s457, 32
        $region90: #{tpu_custom_call.1} parent=85 // pred_fallthru
          _
      $region86: #{tpu_custom_call.1} parent=5 // pred_fallthru
        _
    $region6: #{tpu_custom_call.1} parent=1 // loop_footer
      %s18 = sadd.s32 1, %s14
    $region7: #{tpu_custom_call.1} parent=1 // loop_footer_branch
      %13 = sbr.rel target = $region3
    $region8: #{tpu_custom_call.1} parent=1 // loop_exit
      _
    %463 = vsyncpa [#allocation4], 1
    %s464 = scalar_lea.sflag [#allocation4], 1
    %465 = vsyncpa %s464, 1

</llo_original>
